<compile_context>
chip_gen: v7x
topology: tpu7x:2x2x1
jax: 0.10.0
libtpu: 0.0.40
codegen_flags: <defaults>
</compile_context>

<pallas_src>
import jax
import jax.numpy as jnp
from jax.experimental import pallas as pl
from jax.experimental.pallas import tpu as pltpu


MODALITIES = {"d1": ["s2", "aerial"]}   # encoder.modalities
RATIO = 0.0                             # JEPAAnyMulti(ratio=0.0) default -> no masked_token path

_VMEM_LIMIT_BYTES = 48 * 1024 * 1024    # explicit scoped VMEM; fits v7x's 64 MiB physical w/ headroom
_ACT_VMEM_BUDGET = _VMEM_LIMIT_BYTES // 2


# ---------------------------------------------------------------------------
# Probe: can we single-buffer index-invariant (weight) blocks?
# ---------------------------------------------------------------------------

def _probe_copy_kernel(x_ref, o_ref):
    o_ref[...] = x_ref[...]


def _probe_single_buffer_mode():
    """Return pl.Buffered(1) if this Pallas build accepts it, else None."""
    try:
        mode = pl.Buffered(buffer_count=1)
        f = pl.pallas_call(
            _probe_copy_kernel,
            out_shape=jax.ShapeDtypeStruct((8, 128), jnp.float32),
            grid=(1,),
            in_specs=[pl.BlockSpec((8, 128), lambda i: (0, 0), pipeline_mode=mode)],
            out_specs=pl.BlockSpec((8, 128), lambda i: (0, 0)),
        )
        jax.block_until_ready(f(jnp.zeros((8, 128), jnp.float32)))
        return mode
    except Exception:
        return None


_WEIGHT_PIPELINE_MODE = _probe_single_buffer_mode()


def _weight_buffer_mult():
    return 1 if _WEIGHT_PIPELINE_MODE is not None else 2


def _const_spec(shape):
    """BlockSpec for an index-invariant (weight / bias) block, single-buffered if possible."""
    idx = lambda b: (0,) * len(shape)
    if _WEIGHT_PIPELINE_MODE is not None:
        return pl.BlockSpec(shape, idx, pipeline_mode=_WEIGHT_PIPELINE_MODE)
    return pl.BlockSpec(shape, idx)


def _pick_batch_block(bm, per_sample_bytes, weight_bytes, budget=_ACT_VMEM_BUDGET):
    """Largest divisor of bm whose activation tiles (+ resident weights) fit the budget.

    NOTE(v7x): if this resolves to a single grid step on a 2-TensorCore part,
    halving bblk would restore 'parallel' sharding across TCs; not forced here
    (on v5e/v6e there is a single TC and bigger tiles win).
    """
    avail = budget - weight_bytes
    if avail <= per_sample_bytes:
        bblk = 1
    else:
        bblk = int(min(bm, max(1, avail // per_sample_bytes)))
    while bm % bblk:
        bblk -= 1
    return bblk


# ---------------------------------------------------------------------------
# Pallas kernels
# ---------------------------------------------------------------------------

def _layernorm(z, g, b):
    mu = jnp.mean(z, axis=-1, keepdims=True)
    var = jnp.mean((z - mu) ** 2, axis=-1, keepdims=True)
    return (z - mu) * jax.lax.rsqrt(var + 1e-5) * g + b   # eps matches nn.LayerNorm


def _fused_proj_kernel(feat_ref, w_ref, b_ref, o_ref):
    """Block-diagonal modality projection, output written directly in
    [bblk, (s2 tokens | aerial tokens), D] layout (no XLA transpose afterwards).

    feat_ref [bblk, P, C] f32, w_ref [C, 2D] bf16, b_ref [1, 2D] f32,
    o_ref [bblk, 2P, D] bf16.
    """
    bblk, p_, c = feat_ref.shape
    d2 = w_ref.shape[1]
    d = d2 // 2
    x = feat_ref[...].reshape(bblk * p_, c)
    tok = jnp.dot(x.astype(jnp.bfloat16), w_ref[...],
                  preferred_element_type=jnp.float32)
    tok = (tok + b_ref[...].astype(jnp.float32)).reshape(bblk, p_, d2)
    o_ref[:, :p_, :] = tok[:, :, :d].astype(o_ref.dtype)    # s2 tokens
    o_ref[:, p_:, :] = tok[:, :, d:].astype(o_ref.dtype)    # aerial tokens


def pallas_fused_proj(feat, w, b, d):
    """feat [B, P, C] -> tokens [B, 2P, D] bf16 (s2 rows then aerial rows)."""
    bsz, p_, c = feat.shape
    dout = w.shape[1]
    wbytes = _weight_buffer_mult() * (c * dout * 2 + dout * 4)
    psample = 2 * (p_ * c * 4) + 2 * (2 * p_ * d * 2) + p_ * dout * 4
    bblk = _pick_batch_block(bsz, psample, wbytes)
    return pl.pallas_call(
        _fused_proj_kernel,
        out_shape=jax.ShapeDtypeStruct((bsz, 2 * p_, d), jnp.bfloat16),
        grid=(bsz // bblk,),
        in_specs=[pl.BlockSpec((bblk, p_, c), lambda i: (i, 0, 0)),
                  _const_spec((c, dout)),
                  _const_spec((1, dout))],
        out_specs=pl.BlockSpec((bblk, 2 * p_, d), lambda i: (i, 0, 0)),
        compiler_params=pltpu.CompilerParams(
            dimension_semantics=("parallel",),
            vmem_limit_bytes=_VMEM_LIMIT_BYTES),
    )(feat, w, b.reshape(1, dout))


def _transformer_block_kernel(x_ref, cls_ref, wqkv_ref, wo_ref, w1_ref, w2_ref,
                              misc_ref, o_ref):
    """Pre-LN transformer block over a [bblk, N, D] tile; cls token prepended in-kernel.

    Weights (bf16): wqkv [D, 3D] (Q cols pre-scaled by 1/sqrt(D)), wo [D, D],
    w1 [D, hid], w2 [hid, D].  misc [8, hid] f32 rows:
    b1, b2(:D), ln1_g(:D), ln1_b(:D), ln2_g(:D), ln2_b(:D).
    Output: [bblk, N+1, D] bf16.
    """
    bblk, n, d = x_ref.shape
    nt = n + 1
    m = bblk * nt
    misc = misc_ref[...]
    b1 = misc[0:1, :]
    b2 = misc[1:2, :d]
    g1 = misc[2:3, :d]
    be1 = misc[3:4, :d]
    g2 = misc[4:5, :d]
    be2 = misc[5:6, :d]
    wqkv = wqkv_ref[...]
    wo = wo_ref[...]
    w1 = w1_ref[...]
    w2 = w2_ref[...]

    # Prepend cls token inside the kernel (avoids a whole-tensor XLA concat).
    cls = jnp.broadcast_to(cls_ref[...].astype(jnp.float32)[None], (bblk, 1, d))
    x = jnp.concatenate([cls, x_ref[...].astype(jnp.float32)], axis=1)   # [bblk, nt, d]
    xf = x.reshape(m, d)

    # --- pre-LN single-head self-attention; dense GEMMs flattened to M = bblk*nt ---
    h = _layernorm(xf, g1, be1)
    qkv = jnp.dot(h.astype(jnp.bfloat16), wqkv,
                  preferred_element_type=jnp.float32)                     # [m, 3d]
    qkv = qkv.reshape(bblk, nt, 3 * d)
    q = qkv[:, :, :d]            # 1/sqrt(d) already folded into wqkv's Q columns
    k = qkv[:, :, d:2 * d]
    v = qkv[:, :, 2 * d:]
    s = jnp.einsum('bqd,bkd->bqk', q.astype(jnp.bfloat16), k.astype(jnp.bfloat16),
                   preferred_element_type=jnp.float32)
    s = s - jnp.max(s, axis=-1, keepdims=True)
    p = jnp.exp(s)                                                        # f32 softmax
    p = p * pl.reciprocal(jnp.sum(p, axis=-1, keepdims=True), approx=True)
    a = jnp.einsum('bqk,bkd->bqd', p.astype(jnp.bfloat16), v.astype(jnp.bfloat16),
                   preferred_element_type=jnp.float32).reshape(m, d)
    xf = xf + jnp.dot(a.astype(jnp.bfloat16), wo, preferred_element_type=jnp.float32)

    # --- pre-LN MLP (flattened GEMMs) ---
    h2 = _layernorm(xf, g2, be2)
    mlp = jnp.dot(h2.astype(jnp.bfloat16), w1, preferred_element_type=jnp.float32) + b1
    mlp = jax.nn.gelu(mlp, approximate=True)   # TODO(synk): PyTorch default GELU is exact erf
    xf = xf + jnp.dot(mlp.astype(jnp.bfloat16), w2,
                      preferred_element_type=jnp.float32) + b2

    o_ref[...] = xf.reshape(bblk, nt, d).astype(o_ref.dtype)


def _transformer_per_sample_bytes(n, d, hid):
    nt = n + 1
    io = 2 * (n * d * 2) + 2 * (nt * d * 2)          # double-buffered bf16 in/out tiles
    work = nt * (8 * d + hid + 2 * nt) * 4           # f32 intermediates (x, qkv, scores, mlp)
    return io + work


def pallas_transformer_block(x, cls_tok, p):
    """x: [Bm, N, D] bf16, cls_tok: [1, 1, D] -> [Bm, N+1, D] bf16 (cls row at index 0)."""
    bm, n, d = x.shape
    hid = p['w1'].shape[1]
    nt = n + 1
    wbytes = _weight_buffer_mult() * ((4 * d * d + 2 * d * hid) * 2 + 8 * hid * 4)
    bblk = _pick_batch_block(bm, _transformer_per_sample_bytes(n, d, hid), wbytes)
    return pl.pallas_call(
        _transformer_block_kernel,
        out_shape=jax.ShapeDtypeStruct((bm, nt, d), jnp.bfloat16),
        grid=(bm // bblk,),
        in_specs=[pl.BlockSpec((bblk, n, d), lambda b: (b, 0, 0)),
                  _const_spec((1, d)),
                  _const_spec((d, 3 * d)),
                  _const_spec((d, d)),
                  _const_spec((d, hid)),
                  _const_spec((hid, d)),
                  _const_spec((8, hid))],
        out_specs=pl.BlockSpec((bblk, nt, d), lambda b: (b, 0, 0)),
        compiler_params=pltpu.CompilerParams(
            dimension_semantics=("parallel",),
            vmem_limit_bytes=_VMEM_LIMIT_BYTES),
    )(x, cls_tok.reshape(1, d).astype(jnp.float32),
      p['wqkv'], p['wo'], p['w1'], p['w2'], p['misc'])


def _cross_attn_kernel(q_ref, ctx_ref, wq_ref, wkv_ref, wo_ref, bo_ref, o_ref):
    """JEPA predictor cross-attention over a [bblk, ...] tile.

    wq [Dp, Dp] (pre-scaled by 1/sqrt(Dp)), wkv [D, 2*Dp] (fused K|V),
    wo [Dp, D] (all bf16); bo [1, D] f32.  Dense GEMMs flattened across bblk.
    """
    bblk, nq, dp = q_ref.shape
    _, nc, d = ctx_ref.shape
    mq = bblk * nq
    mc = bblk * nc
    wq = wq_ref[...]
    wkv = wkv_ref[...]
    wo = wo_ref[...]
    bo = bo_ref[...].astype(jnp.float32)

    q = jnp.dot(q_ref[...].reshape(mq, dp).astype(jnp.bfloat16), wq,
                preferred_element_type=jnp.float32).reshape(bblk, nq, dp)
    kv = jnp.dot(ctx_ref[...].reshape(mc, d).astype(jnp.bfloat16), wkv,
                 preferred_element_type=jnp.float32).reshape(bblk, nc, 2 * dp)
    k = kv[:, :, :dp]
    v = kv[:, :, dp:]
    s = jnp.einsum('bqd,bkd->bqk', q.astype(jnp.bfloat16), k.astype(jnp.bfloat16),
                   preferred_element_type=jnp.float32)      # 1/sqrt(dp) folded into wq
    s = s - jnp.max(s, axis=-1, keepdims=True)
    p = jnp.exp(s)
    p = p * pl.reciprocal(jnp.sum(p, axis=-1, keepdims=True), approx=True)
    a = jnp.einsum('bqk,bkd->bqd', p.astype(jnp.bfloat16), v.astype(jnp.bfloat16),
                   preferred_element_type=jnp.float32).reshape(mq, dp)
    out = jnp.dot(a.astype(jnp.bfloat16), wo, preferred_element_type=jnp.float32) + bo
    o_ref[...] = out.reshape(bblk, nq, d).astype(o_ref.dtype)


def pallas_cross_attention(queries, context, p):
    """queries: [B, Np, Dp] bf16, context: [Bm, Nc, D] bf16 (Bm = B * n_masks)
    -> [Bm, Np, D] f32.  Queries are NOT tiled n_masks times in HBM; their
    BlockSpec index_map re-reads the same block for each mask copy."""
    b, npred, dp = queries.shape
    bm, nc, d = context.shape
    wbytes = _weight_buffer_mult() * ((dp * dp + 2 * d * dp + dp * d) * 2 + d * 4)
    psample = (2 * (npred * dp * 2) + 2 * (nc * d * 2) + 2 * (npred * d * 4)
               + (npred * dp + nc * 2 * dp + 2 * npred * nc + npred * d) * 4)
    bblk = _pick_batch_block(b, psample, wbytes)   # divisor of B -> also divides Bm
    qblocks = b // bblk
    return pl.pallas_call(
        _cross_attn_kernel,
        out_shape=jax.ShapeDtypeStruct((bm, npred, d), jnp.float32),
        grid=(bm // bblk,),
        in_specs=[pl.BlockSpec((bblk, npred, dp), lambda i: (i % qblocks, 0, 0)),
                  pl.BlockSpec((bblk, nc, d), lambda i: (i, 0, 0)),
                  _const_spec((dp, dp)),
                  _const_spec((d, 2 * dp)),
                  _const_spec((dp, d)),
                  _const_spec((1, d))],
        out_specs=pl.BlockSpec((bblk, npred, d), lambda i: (i, 0, 0)),
        compiler_params=pltpu.CompilerParams(
            dimension_semantics=("parallel",),
            vmem_limit_bytes=_VMEM_LIMIT_BYTES),
    )(queries, context, p['wq'], p['wkv'], p['wo'], p['bo'].reshape(1, d))


# ---------------------------------------------------------------------------
# JEPAAnyMulti forward-pass plumbing (glue in plain JAX)
# ---------------------------------------------------------------------------

def apply_masks(x, masks, modalities):
    """x: [B, N, D]; masks: list of [B, n_keep] patch-index arrays (per modality copies)."""
    n_mod = len(modalities) - int('modis' in modalities)
    n_patches = x.shape[1] // n_mod
    all_x = []
    for m in masks:
        idx = jnp.concatenate([m + i * n_patches for i in range(n_mod)], axis=1)
        all_x.append(jnp.take_along_axis(x, idx[:, :, None], axis=1))
    return jnp.concatenate(all_x, axis=0), masks[-1]


def mask_dates(imgs, key, ratio=0.5):
    """Randomly keep (1-ratio) of dates per batch element for dated modalities."""
    modalities = set()
    for v in MODALITIES.values():
        modalities.update(v)
    keys = [k for k in imgs if k != 'name']
    for modality in sorted(modalities):
        if modality + '_dates' in keys:
            dates = imgs[modality + '_dates']
            n, t = dates.shape
            keep = int(t * (1 - ratio))
            key, sub = jax.random.split(key)
            noise = jax.random.uniform(sub, (n, t))
            indices = jnp.argsort(noise, axis=1)[:, :keep]
            imgs[modality] = jnp.take_along_axis(
                imgs[modality], indices[:, :, None, None], axis=1)
            imgs[modality + '_dates'] = jnp.take_along_axis(dates, indices, axis=1)
            if modality + '_mask' in keys:
                imgs[modality + '_mask'] = jnp.take_along_axis(
                    imgs[modality + '_mask'], indices, axis=1)
    return imgs


def encoder_forward_proj(params, imgs):
    """Synthetic encoder.forward_proj: both modality projections as ONE fused
    block-diagonal GEMM writing tokens directly in [B, 2P, D] order.

    The leading cls row forward_proj would normally emit is elided: with no
    'modis' modality and ratio == 0, forward_encoder drops tokens[:, 0, :]
    unconditionally, so never materializing it is semantically identical.
    """
    s2 = imgs['s2']          # [B, T', P, C_s2]
    aerial = imgs['aerial']  # [B, P, C_aer]
    d = params['w_proj'].shape[1] // 2
    s2_feat = jnp.mean(s2, axis=1)                                # temporal pool -> [B, P, C_s2]
    feat = jnp.concatenate([s2_feat, aerial], axis=-1)            # [B, P, C_s2 + C_aer]
    tokens = pallas_fused_proj(feat, params['w_proj'], params['b_proj'], d)  # [B, 2P, D] bf16
    return tokens, {}


def encoder_forward_transformer(params, tokens, mask, dataset, scale):
    """Synthetic encoder.forward_transformer: cls token prepended in-kernel, one block."""
    return pallas_transformer_block(tokens, params['cls_token_tr'], params['blk'])


def predictor(params, tokens, mask_enc, mask_pred, dataset, scale):
    """Synthetic JEPA predictor: mask-position queries cross-attend to context tokens."""
    p = params['pred']
    mp_all = jnp.concatenate(mask_pred, axis=1)       # [B, n_pred_total]
    pos_q = p['pos_embed'][mp_all]                    # [B, n_pred_total, Dp]
    queries = (pos_q + p['mask_tok']).astype(jnp.bfloat16)
    # Query block is re-used per mask copy inside pallas_cross_attention
    # (no jnp.concatenate([queries] * n_masks) materialization).
    return pallas_cross_attention(queries, tokens, p)


def jepa_any_multi_forward(params, imgs, mask_enc, mask_pred, key):
    imgs = dict(imgs)
    imgs = mask_dates(imgs, key)                                  # self.mask_dates (default ratio=0.5)
    # ---- forward_encoder ----
    tokens, out = encoder_forward_proj(params, imgs)              # [B, 2P, D] (cls row elided)
    modalities = MODALITIES[imgs['dataset']]
    tokens, mask = apply_masks(tokens, mask_enc, modalities)
    # TODO(synk): mask_modalities (ratio > 0 branch: randint/argsort/one_hot blend
    # with masked_token) is not exercised since RATIO == 0.0 (the module default).
    tokens = encoder_forward_transformer(params, tokens, mask,
                                         imgs['dataset'], imgs['scale'])
    out['dataset'] = imgs['dataset']
    out['scale'] = imgs['scale']
    # ---- forward_decoder ----
    out['predicted_tokens'] = predictor(params, tokens[:, 1:, :],
                                        mask_enc, mask_pred,
                                        out['dataset'], out['scale'])
    return out


# ---------------------------------------------------------------------------
# Deterministic parameter init (weights for MXU matmuls stored in bf16)
# ---------------------------------------------------------------------------

def init_params(key, c_s2, c_aer, d, dp, n_patches):
    ks = jax.random.split(key, 16)
    wf = lambda k, s: (0.02 * jax.random.normal(k, s)).astype(jnp.float32)
    hid = 4 * d

    # Fused block-diagonal modality projection: [C_s2 + C_aer, 2D]
    w_s2 = wf(ks[0], (c_s2, d))
    w_aer = wf(ks[1], (c_aer, d))
    w_proj = jnp.zeros((c_s2 + c_aer, 2 * d), jnp.float32)
    w_proj = w_proj.at[:c_s2, :d].set(w_s2).at[c_s2:, d:].set(w_aer)
    b_proj = jnp.zeros((2 * d,), jnp.float32)          # concat(b_s2, b_aer)

    # Packed bias / LayerNorm params: rows = b1, b2, ln1_g, ln1_b, ln2_g, ln2_b, 0, 0
    misc = jnp.zeros((8, hid), jnp.float32)
    misc = misc.at[2, :d].set(1.0).at[4, :d].set(1.0)  # ln gains = 1

    # Fused Q|K|V; the 1/sqrt(d) attention scale is folded into the Q columns.
    wqkv = wf(ks[2], (d, 3 * d))
    wqkv = wqkv.at[:, :d].multiply(1.0 / (d ** 0.5))

    blk = {
        'wqkv': wqkv.astype(jnp.bfloat16),
        'wo': wf(ks[3], (d, d)).astype(jnp.bfloat16),
        'w1': wf(ks[4], (d, hid)).astype(jnp.bfloat16),
        'w2': wf(ks[5], (hid, d)).astype(jnp.bfloat16),
        'misc': misc,
    }
    # Predictor; 1/sqrt(dp) folded into wq.
    pred = {
        'mask_tok': wf(ks[6], (1, 1, dp)),
        'pos_embed': wf(ks[7], (n_patches, dp)),
        'wq': (wf(ks[8], (dp, dp)) * (1.0 / (dp ** 0.5))).astype(jnp.bfloat16),
        'wkv': wf(ks[9], (d, 2 * dp)).astype(jnp.bfloat16),   # fused K|V
        'wo': wf(ks[10], (dp, d)).astype(jnp.bfloat16),
        'bo': jnp.zeros((d,), jnp.float32),
    }
    return {
        'w_proj': w_proj.astype(jnp.bfloat16),
        'b_proj': b_proj,
        'cls_token_tr': wf(ks[12], (1, 1, d)),
        'blk': blk,
        'pred': pred,
    }


# ---------------------------------------------------------------------------
# Main
# ---------------------------------------------------------------------------

if __name__ == "__main__":
    key = jax.random.PRNGKey(0)
    B, T, P = 2, 8, 4
    C_S2, C_AER, D, DP = 4, 4, 32, 16

    k_s2, k_aer, k_dates, k_params = jax.random.split(key, 4)
    imgs = {
        'dataset': 'd1',
        'scale': 1,
        's2': jax.random.normal(k_s2, (B, T, P, C_S2), jnp.float32),
        's2_dates': jnp.arange(B * T, dtype=jnp.int32).reshape(B, T),
        'aerial': jax.random.normal(k_aer, (B, P, C_AER), jnp.float32),
    }
    mask_enc = [jnp.array([[0, 1], [2, 3]], jnp.int32),
                jnp.array([[1, 2], [0, 3]], jnp.int32)]
    mask_pred = [jnp.array([[2, 3], [0, 1]], jnp.int32),
                 jnp.array([[0, 3], [1, 2]], jnp.int32)]

    params = init_params(k_params, C_S2, C_AER, D, DP, P)
    out = jepa_any_multi_forward(params, imgs, mask_enc, mask_pred, k_dates)
    pred_tokens = jax.block_until_ready(out['predicted_tokens'])
    assert pred_tokens.shape == (B * len(mask_enc), 2 * len(mask_pred), D)
    assert bool(jnp.all(jnp.isfinite(pred_tokens)))
    print("KERNEL_OK")
</pallas_src>

<mosaic_0001>
module attributes {stable_mosaic.version = 11 : i64} {
  func.func @_probe_copy_kernel(%arg0: i32, %arg1: memref<8x128xf32, #tpu.memory_space<vmem>>, %arg2: memref<8x128xf32, #tpu.memory_space<vmem>>) attributes {dimension_semantics = [#tpu.dimension_semantics<arbitrary>], iteration_bounds = array<i64: 1>, scalar_prefetch = 0 : i64, scratch_operands = 0 : i64, tpu.core_type = #tpu.core_type<tc>, window_params = [{pipeline_mode = #tpu.pipeline_mode<synchronous>, transform_indices = @transform_0, window_bounds = array<i64: 8, 128>}, {pipeline_mode = #tpu.pipeline_mode<synchronous>, transform_indices = @transform_1, window_bounds = array<i64: 8, 128>}]} {
    %c0 = arith.constant 0 : index
    %c0_0 = arith.constant 0 : index
    %0 = vector.load %arg1[%c0, %c0_0] : memref<8x128xf32, #tpu.memory_space<vmem>>, vector<8x128xf32>
    %c0_1 = arith.constant 0 : index
    %c0_2 = arith.constant 0 : index
    %1 = vector.load %arg2[%c0_1, %c0_2] : memref<8x128xf32, #tpu.memory_space<vmem>>, vector<8x128xf32>
    tpu.vector_store %arg2[%c0_1, %c0_2], %0 {strides = array<i32>} : memref<8x128xf32, #tpu.memory_space<vmem>>, vector<8x128xf32>,
    return
  }
  func.func @transform_0(%arg0: i32) -> (i32, i32) {
    %c0_i32 = arith.constant 0 : i32
    %c0_i32_0 = arith.constant 0 : i32
    %c0_i32_1 = arith.constant 0 : i32
    return %c0_i32, %c0_i32_0 : i32, i32
  }
  func.func @transform_1(%arg0: i32) -> (i32, i32) {
    %c0_i32 = arith.constant 0 : i32
    %c0_i32_0 = arith.constant 0 : i32
    %c0_i32_1 = arith.constant 0 : i32
    return %c0_i32, %c0_i32_0 : i32, i32
  }
}

module attributes {stable_mosaic.version = 11 : i64} {
  func.func @_fused_proj_kernel(%arg0: i32, %arg1: memref<2x4x8xf32, #tpu.memory_space<vmem>>, %arg2: memref<8x64xbf16, #tpu.memory_space<vmem>>, %arg3: memref<1x64xf32, #tpu.memory_space<vmem>>, %arg4: memref<2x8x32xbf16, #tpu.memory_space<vmem>>) attributes {dimension_semantics = [#tpu.dimension_semantics<parallel>], iteration_bounds = array<i64: 1>, scalar_prefetch = 0 : i64, scratch_operands = 0 : i64, tpu.core_type = #tpu.core_type<tc>, window_params = [{transform_indices = @transform_0, window_bounds = array<i64: 2, 4, 8>}, {pipeline_mode = #tpu.pipeline_mode<synchronous>, transform_indices = @transform_1, window_bounds = array<i64: 8, 64>}, {pipeline_mode = #tpu.pipeline_mode<synchronous>, transform_indices = @transform_2, window_bounds = array<i64: 1, 64>}, {transform_indices = @transform_3, window_bounds = array<i64: 2, 8, 32>}]} {
    %c0 = arith.constant 0 : index
    %c0_0 = arith.constant 0 : index
    %c0_1 = arith.constant 0 : index
    %0 = vector.load %arg1[%c0, %c0_0, %c0_1] : memref<2x4x8xf32, #tpu.memory_space<vmem>>, vector<2x4x8xf32>
    %1 = vector.shape_cast %0 : vector<2x4x8xf32> to vector<8x8xf32>
    %2 = arith.truncf %1 : vector<8x8xf32> to vector<8x8xbf16>
    %c0_2 = arith.constant 0 : index
    %c0_3 = arith.constant 0 : index
    %3 = vector.load %arg2[%c0_2, %c0_3] : memref<8x64xbf16, #tpu.memory_space<vmem>>, vector<8x64xbf16>
    %cst = arith.constant dense<0.000000e+00> : vector<8x64xf32>
    %4 = tpu.matmul %2, %3, %cst {dimension_numbers = #tpu.dot_dimension_numbers<[1], [0], [0], [1], [0, 0, 1, 1], [], []>} : vector<8x8xbf16>, vector<8x64xbf16>, vector<8x64xf32> -> vector<8x64xf32>
    %c0_4 = arith.constant 0 : index
    %c0_5 = arith.constant 0 : index
    %5 = vector.load %arg3[%c0_4, %c0_5] : memref<1x64xf32, #tpu.memory_space<vmem>>, vector<1x64xf32>
    %6 = vector.broadcast %5 : vector<1x64xf32> to vector<8x64xf32>
    %7 = arith.addf %4, %6 : vector<8x64xf32>
    %8 = vector.shape_cast %7 : vector<8x64xf32> to vector<2x4x64xf32>
    %9 = vector.extract_strided_slice %8 {offsets = [0, 0, 0], sizes = [2, 4, 32], strides = [1, 1, 1]} : vector<2x4x64xf32> to vector<2x4x32xf32>
    %10 = arith.truncf %9 : vector<2x4x32xf32> to vector<2x4x32xbf16>
    %c0_6 = arith.constant 0 : index
    %c0_7 = arith.constant 0 : index
    %c0_8 = arith.constant 0 : index
    %11 = vector.load %arg4[%c0_6, %c0_7, %c0_8] : memref<2x8x32xbf16, #tpu.memory_space<vmem>>, vector<2x4x32xbf16>
    tpu.vector_store %arg4[%c0_6, %c0_7, %c0_8], %10 {strides = array<i32>} : memref<2x8x32xbf16, #tpu.memory_space<vmem>>, vector<2x4x32xbf16>,
    %12 = vector.extract_strided_slice %8 {offsets = [0, 0, 32], sizes = [2, 4, 32], strides = [1, 1, 1]} : vector<2x4x64xf32> to vector<2x4x32xf32>
    %13 = arith.truncf %12 : vector<2x4x32xf32> to vector<2x4x32xbf16>
    %c0_9 = arith.constant 0 : index
    %c4 = arith.constant 4 : index
    %c0_10 = arith.constant 0 : index
    %14 = vector.load %arg4[%c0_9, %c4, %c0_10] : memref<2x8x32xbf16, #tpu.memory_space<vmem>>, vector<2x4x32xbf16>
    tpu.vector_store %arg4[%c0_9, %c4, %c0_10], %13 {strides = array<i32>} : memref<2x8x32xbf16, #tpu.memory_space<vmem>>, vector<2x4x32xbf16>,
    return
  }
  func.func @transform_0(%arg0: i32) -> (i32, i32, i32) {
    %c0_i32 = arith.constant 0 : i32
    %c0_i32_0 = arith.constant 0 : i32
    %c0_i32_1 = arith.constant 0 : i32
    return %arg0, %c0_i32, %c0_i32_0 : i32, i32, i32
  }
  func.func @transform_1(%arg0: i32) -> (i32, i32) {
    %c0_i32 = arith.constant 0 : i32
    %c0_i32_0 = arith.constant 0 : i32
    %c0_i32_1 = arith.constant 0 : i32
    return %c0_i32, %c0_i32_0 : i32, i32
  }
  func.func @transform_2(%arg0: i32) -> (i32, i32) {
    %c0_i32 = arith.constant 0 : i32
    %c0_i32_0 = arith.constant 0 : i32
    %c0_i32_1 = arith.constant 0 : i32
    return %c0_i32, %c0_i32_0 : i32, i32
  }
  func.func @transform_3(%arg0: i32) -> (i32, i32, i32) {
    %c0_i32 = arith.constant 0 : i32
    %c0_i32_0 = arith.constant 0 : i32
    %c0_i32_1 = arith.constant 0 : i32
    return %arg0, %c0_i32, %c0_i32_0 : i32, i32, i32
  }
}

</mosaic_0001>

<llo_original>
// kernel: tpu_custom_call.1
$region0: #{tpu_custom_call.1}
  #allocation0 [shape = 'u32[]', space=smem, size = 0x4, offset = 0x4, fixed_abs, tag = 'smem constant byte address 0x4 - core index']
  #allocation1 [shape = 'u32[144,128]{1,0:T(1,128)}', space=vmem, size = 0x12000, scoped, tag = 'internal scratch']
  %s0 = inlined_call_operand.hbm [shape: f32[8,128], index: 0, kind: input, shape index: {}]
  %s1 = inlined_call_operand.hbm [shape: f32[8,128], index: 1, kind: output, shape index: {}]
  %s2 = sld [smem:[#allocation0]]
  $region18: #{tpu_custom_call.1} parent=0
    _
  %s4 = ssub.s32 1, %s2
  %s5 = scalar_select 0, %s4, %s2
  $region1: #{tpu_custom_call.1} parent=0
    #allocation2 [shape = 'u8[4096]{0}', space=vmem, size = 0x1000, scoped, tag = 'input window, operand 0, single buffered']
    #allocation3 [shape = 's32[1]{0}', space=sflag, size = 0x4, scoped, tag = 'scoped memory for tpu_custom_call.1']
    #allocation4 [shape = 's32[1]{0}', space=sflag, size = 0x4, scoped, tag = 'scoped memory for tpu_custom_call.1']
    #allocation5 [shape = 'u8[4096]{0}', space=vmem, size = 0x1000, scoped, tag = 'output window, operand 0, single buffered']
    %6 = vsyncpa [#allocation3], 0
    %7 = vsyncpa [#allocation4], 0
    // Predicated region
    $region2: #{tpu_custom_call.1} parent=1 // pred_check
      _
    $region3: #{tpu_custom_call.1} parent=1 // pred_check_branch
      %9 = sbr.rel (0) target = $region5
    $region4: #{tpu_custom_call.1} parent=1 // pred_region
      %s11 = ssub.s32 128, 128
      %12 = vsyncadd [#allocation3], %s11
      %s14 = sshll.u32 [#allocation2], 4
      %s15 = int_to_ptr.vmem [resolvable:$true] %s14
      %17 = dma.hbm_to_vmem [thread:$0]  %s0, 128, %s15, [#allocation3]
    $region5: #{tpu_custom_call.1} parent=1 // pred_fallthru
      _
    // Predicated region
    $region6: #{tpu_custom_call.1} parent=1 // pred_check
      _
    $region7: #{tpu_custom_call.1} parent=1 // pred_check_branch
      %19 = sbr.rel (0) target = $region9
    $region8: #{tpu_custom_call.1} parent=1 // pred_region
      %20 = dma.done [#allocation3], 128
    $region9: #{tpu_custom_call.1} parent=1 // pred_fallthru
      _
    %v21 = vld [vmem:[#allocation2] sm:$0xff]
    %22 = vst [vmem:[#allocation5] sm:$0xff] %v21
    // Predicated region
    $region10: #{tpu_custom_call.1} parent=1 // pred_check
      _
    $region11: #{tpu_custom_call.1} parent=1 // pred_check_branch
      %24 = sbr.rel (0) target = $region13
    $region12: #{tpu_custom_call.1} parent=1 // pred_region
      %s26 = ssub.s32 128, 128
      %27 = vsyncadd [#allocation4], %s26
      %s29 = sshll.u32 [#allocation5], 4
      %s30 = int_to_ptr.vmem [resolvable:$true] %s29
      %32 = dma.vmem_to_hbm [thread:$0]  %s30, 128, %s1, [#allocation4]
    $region13: #{tpu_custom_call.1} parent=1 // pred_fallthru
      _
    // Predicated region
    $region14: #{tpu_custom_call.1} parent=1 // pred_check
      _
    $region15: #{tpu_custom_call.1} parent=1 // pred_check_branch
      %34 = sbr.rel (0) target = $region17
    $region16: #{tpu_custom_call.1} parent=1 // pred_region
      %35 = dma.done [#allocation4], 128
    $region17: #{tpu_custom_call.1} parent=1 // pred_fallthru
      _
    %36 = vsyncpa [#allocation3], 1
    %37 = vsyncpa [#allocation4], 1

// kernel: tpu_custom_call.1
$region0: #{tpu_custom_call.1}
  #allocation0 [shape = 'u32[]', space=smem, size = 0x4, offset = 0x4, fixed_abs, tag = 'smem constant byte address 0x4 - core index']
  #allocation1 [shape = 'u32[144,128]{1,0:T(1,128)}', space=vmem, size = 0x12000, scoped, tag = 'internal scratch']
  %s0 = inlined_call_operand.hbm [shape: f32[2,4,8], index: 0, kind: input, shape index: {}]
  %s1 = inlined_call_operand.hbm [shape: bf16[8,64], index: 1, kind: input, shape index: {}]
  %s2 = inlined_call_operand.vmem [shape: f32[1,64], index: 2, kind: input, shape index: {}]
  %s3 = inlined_call_operand.hbm [shape: bf16[2,8,32], index: 3, kind: output, shape index: {}]
  %s4 = sld [smem:[#allocation0]]
  $region30: #{tpu_custom_call.1} parent=0
    _
  %s6 = ssub.s32 1, %s4
  %s7 = scalar_select 0, %s6, %s4
  $region1: #{tpu_custom_call.1} parent=0
    #allocation2 [shape = 'u8[4096]{0}', space=vmem, size = 0x1000, scoped, tag = 'input window, operand 0, single buffered']
    #allocation3 [shape = 's32[1]{0}', space=sflag, size = 0x4, scoped, tag = 'scoped memory for tpu_custom_call.1']
    #allocation4 [shape = 's32[1]{0}', space=sflag, size = 0x4, scoped, tag = 'scoped memory for tpu_custom_call.1']
    #allocation5 [shape = 'u8[2048]{0}', space=vmem, size = 0x800, scoped, tag = 'input window, operand 1, single buffered']
    #allocation6 [shape = 's32[1]{0}', space=sflag, size = 0x4, scoped, tag = 'scoped memory for tpu_custom_call.1']
    #allocation7 [shape = 'u8[4096]{0}', space=vmem, size = 0x1000, scoped, tag = 'output window, operand 0, single buffered']
    %8 = vsyncpa [#allocation3], 0
    %9 = vsyncpa [#allocation6], 0
    %10 = vsyncpa [#allocation4], 0
    // Predicated region
    $region2: #{tpu_custom_call.1} parent=1 // pred_check
      _
    $region3: #{tpu_custom_call.1} parent=1 // pred_check_branch
      %12 = sbr.rel (0) target = $region5
    $region4: #{tpu_custom_call.1} parent=1 // pred_region
      %s14 = ssub.s32 128, 128
      %15 = vsyncadd [#allocation3], %s14
      %s16 = sshll.u32 [#allocation2], 4
      %s17 = int_to_ptr.vmem [resolvable:$true] %s16
      %22 = dma.hbm_to_vmem [thread:$0]  %s0, 128, %s17, [#allocation3], 64, 64, 4
    $region5: #{tpu_custom_call.1} parent=1 // pred_fallthru
      _
    // Predicated region
    $region6: #{tpu_custom_call.1} parent=1 // pred_check
      _
    $region7: #{tpu_custom_call.1} parent=1 // pred_check_branch
      %24 = sbr.rel (0) target = $region9
    $region8: #{tpu_custom_call.1} parent=1 // pred_region
      %s26 = ssub.s32 64, 64
      %27 = vsyncadd [#allocation6], %s26
      %s29 = sshll.u32 [#allocation5], 4
      %s30 = int_to_ptr.vmem [resolvable:$true] %s29
      %32 = dma.hbm_to_vmem [thread:$0]  %s1, 64, %s30, [#allocation6]
    $region9: #{tpu_custom_call.1} parent=1 // pred_fallthru
      _
    // Predicated region
    $region10: #{tpu_custom_call.1} parent=1 // pred_check
      _
    $region11: #{tpu_custom_call.1} parent=1 // pred_check_branch
      %34 = sbr.rel (0) target = $region13
    $region12: #{tpu_custom_call.1} parent=1 // pred_region
      _
    $region13: #{tpu_custom_call.1} parent=1 // pred_fallthru
      _
    // Predicated region
    $region14: #{tpu_custom_call.1} parent=1 // pred_check
      _
    $region15: #{tpu_custom_call.1} parent=1 // pred_check_branch
      %36 = sbr.rel (0) target = $region17
    $region16: #{tpu_custom_call.1} parent=1 // pred_region
      %37 = dma.done [#allocation3], 128
    $region17: #{tpu_custom_call.1} parent=1 // pred_fallthru
      _
    // Predicated region
    $region18: #{tpu_custom_call.1} parent=1 // pred_check
      _
    $region19: #{tpu_custom_call.1} parent=1 // pred_check_branch
      %39 = sbr.rel (0) target = $region21
    $region20: #{tpu_custom_call.1} parent=1 // pred_region
      %40 = dma.done [#allocation6], 64
    $region21: #{tpu_custom_call.1} parent=1 // pred_fallthru
      _
    %v42 = vld [vmem:[#allocation2] sm:$0xf]
    %v43 = vld [vmem:[#allocation2 + $0x4] sm:$0xf]
    %v46 = vcombine.low %v42, %v43
    %v48 = vpack.c.bf16 %v46, %v46
    %v49 = vld [vmem:[#allocation5] sm:$0xf]
    %v50 = vld [vmem:[%s2] sm:$0x1]
    %v52 = vlaneseq
    %v53 = vshrl.u32 %v52, 7
    %v54 = vsub.s32 0, %v53
    %v55 = vrot.slane %v50, %v54
    %vm57 = vcmask 64512
    %v59 = vsel %vm57, %v48, 0
    %vm61 = vcmask 1043456
    %v63 = vsel %vm61, %v49, 0
    %65 = vmatprep.subr.bf16.mxu0 0
    %66 = vmatpush1.bf16.msra.mxu0 %v63
    %67 = vmatprep.subr.bf16.mxu0 0
    %68 = vmatpush1.bf16.msra.mxu0 0
    %69 = vmatprep.subr.bf16.mxu0 0
    %70 = vmatpush1.bf16.msra.mxu0 0
    %71 = vmatprep.subr.bf16.mxu0 0
    %72 = vmatpush1.bf16.msra.mxu0 0
    %73 = vmatprep.subr.bf16.mxu0 0
    %74 = vmatpush1.bf16.msra.mxu0 0
    %75 = vmatprep.subr.bf16.mxu0 0
    %76 = vmatpush1.bf16.msra.mxu0 0
    %77 = vmatprep.subr.bf16.mxu0 0
    %78 = vmatpush1.bf16.msra.mxu0 0
    %79 = vmatprep.subr.bf16.mxu0 0
    %80 = vmatpush1.bf16.msra.mxu0 0
    %81 = vmatprep.subr.bf16.mxu0 0
    %82 = vmatpush1.bf16.msra.mxu0 0
    %83 = vmatprep.subr.bf16.mxu0 0
    %84 = vmatpush1.bf16.msra.mxu0 0
    %85 = vmatprep.subr.bf16.mxu0 0
    %86 = vmatpush1.bf16.msra.mxu0 0
    %87 = vmatprep.subr.bf16.mxu0 0
    %88 = vmatpush1.bf16.msra.mxu0 0
    %89 = vmatprep.subr.bf16.mxu0 0
    %90 = vmatpush1.bf16.msra.mxu0 0
    %91 = vmatprep.subr.bf16.mxu0 0
    %92 = vmatpush1.bf16.msra.mxu0 0
    %93 = vmatprep.subr.bf16.mxu0 0
    %94 = vmatpush1.bf16.msra.mxu0 0
    %95 = vmatprep.subr.bf16.mxu0 0
    %96 = vmatpush1.bf16.msra.mxu0 0
    %97 = vmatprep.mubr.bf16.mxu0 0
    %98 = vmatmul.mubr.bf16.gmra.mrb[0].mxu0 %v59
    %v99 = vpop.f32.mrb[0].mxu0
    %v100 = vadd.f32 %v55, %v99
    %v101 = vpop.f32.mrb[0].mxu0
    %v102 = vpop.f32.mrb[0].mxu0
    %v103 = vpop.f32.mrb[0].mxu0
    %104 = vdwg.mxu0
    %v106 = vcombine.high %v100, %v100
    %v108 = vpack.c.bf16 %v100, %v100
    %v109 = vpack.c.bf16 %v106, %v106
    %vm110 = vcmask 254976
    %111 = vst.msk [vmem:[#allocation7] sm:$0x3] %vm110, %v108
    %112 = vst.msk [vmem:[#allocation7 + $0x4] sm:$0x3] %vm110, %v109
    %v115 = vunpack.c.l.b16 %v108
    %v116 = vunpack.c.l.b16 %v109
    %v117 = vpack.c.b16 %v115, %v115
    %v118 = vpack.c.b16 %v116, %v116
    %v119 = vrot.slane %v117, 6
    %v120 = vrot.slane %v118, 6
    %121 = vrot.lane.b32.xlu0 %v119, 96
    %v122 = vpop.permute.xlu0 %121
    %123 = vrot.lane.b32.xlu0 %v120, 96
    %v124 = vpop.permute.xlu0 %123
    %vm127 = vcmask 257026
    %128 = vst.msk [vmem:[#allocation7] sm:$0xc] %vm127, %v122
    %129 = vst.msk [vmem:[#allocation7 + $0x4] sm:$0xc] %vm127, %v124
    // Predicated region
    $region22: #{tpu_custom_call.1} parent=1 // pred_check
      _
    $region23: #{tpu_custom_call.1} parent=1 // pred_check_branch
      %131 = sbr.rel (0) target = $region25
    $region24: #{tpu_custom_call.1} parent=1 // pred_region
      %s133 = ssub.s32 128, 128
      %134 = vsyncadd [#allocation4], %s133
      %s135 = sshll.u32 [#allocation7], 4
      %s136 = int_to_ptr.vmem [resolvable:$true] %s135
      %141 = dma.vmem_to_hbm [thread:$0]  %s136, 128, %s3, [#allocation4], 64, 64, 4
    $region25: #{tpu_custom_call.1} parent=1 // pred_fallthru
      _
    // Predicated region
    $region26: #{tpu_custom_call.1} parent=1 // pred_check
      _
    $region27: #{tpu_custom_call.1} parent=1 // pred_check_branch
      %143 = sbr.rel (0) target = $region29
    $region28: #{tpu_custom_call.1} parent=1 // pred_region
      %144 = dma.done [#allocation4], 128
    $region29: #{tpu_custom_call.1} parent=1 // pred_fallthru
      _
    %145 = vsyncpa [#allocation3], 1
    %146 = vsyncpa [#allocation6], 1
    %147 = vsyncpa [#allocation4], 1

</llo_original>
